<compile_context>
chip_gen: v6e
topology: v6e:2x2x1
jax: 0.10.0
libtpu: 0.0.40
codegen_flags: <defaults>
</compile_context>

<pallas_src>
import functools

import jax
import jax.numpy as jnp
from jax.experimental import pallas as pl
from jax.experimental.pallas import tpu as pltpu


def _round_up(n: int, m: int) -> int:
    return ((n + m - 1) // m) * m


def _critic_kernel(x_ref, w1_ref, b1_ref, w2_ref, b2_ref, w3_ref, b3_ref, out_ref):
    """One batch tile.

    x_ref  : (TB, input_dim)   MXU dtype (pre-cast in the wrapper)
    w1_ref : (input_dim, H)    MXU dtype, VMEM resident (single-buffered)
    w2_ref : (H, H)            MXU dtype, VMEM resident (single-buffered)
    w3_ref : (1, H)  f32       used on the VPU only
    b1/b2  : (1, H)  f32       b3_ref: (1, 1) scalar in SMEM
    out_ref: (1, TB) f32       lane-dense: batch on lanes
    """
    # fc1 + ReLU  (MXU, f32 accumulation; bias/ReLU on the VPU in f32)
    h1 = jnp.dot(x_ref[...], w1_ref[...], preferred_element_type=jnp.float32)
    h1 = jnp.maximum(h1 + b1_ref[...], 0.0)

    # fc2 + ReLU  (h1 cast to the MXU dtype is a no-op on the f32 path)
    h2 = jnp.dot(h1.astype(w2_ref.dtype), w2_ref[...],
                 preferred_element_type=jnp.float32)
    h2 = jnp.maximum(h2 + b2_ref[...], 0.0)

    # Output layer has N=1: skip the MXU, VPU multiply + cross-lane reduce,
    # write a lane-dense (1, TB) slab directly (unmasked vst).
    v = jnp.sum(h2 * w3_ref[...], axis=-1)                         # (TB,)
    out_ref[...] = (v[None, :] + b3_ref[0, 0]).astype(out_ref.dtype)


@functools.partial(
    jax.jit, static_argnames=("block_b", "matmul_dtype", "single_buffer_weights"))
def critic_forward(x, w1, b1, w2, b2, w3, b3, *, block_b=512,
                   matmul_dtype="float32", single_buffer_weights=True):
    """x: (B, input_dim) f32; w1 (in,hidden), w2 (hidden,hidden), w3 (1,hidden);
    b1/b2 (1,hidden), b3 (1,1). Returns (B, 1) f32.

    matmul_dtype="bfloat16" is recommended on all TPU generations (v5e/v6e/v7x
    MXUs are bf16-native; accumulation stays f32). fp8 dtypes work on v7x.
    """
    B, input_dim = x.shape
    hidden = w1.shape[1]
    md = jnp.dtype(matmul_dtype)

    # ---- batch-tile selection -------------------------------------------------
    # TB must be a multiple of 128 (lane-dense out block + x sublane tiling).
    block_b = max(128, _round_up(int(block_b), 128))
    B128 = _round_up(B, 128)
    if B128 >= 2 * 128:
        # Guarantee >= 2 grid tiles: megacore sharding on v7x and at least one
        # pipeline prefetch step; neutral on v5e/v6e.
        TB = min(block_b, max(128, ((B128 // 2) // 128) * 128))
    else:
        TB = 128
    B_pad = _round_up(B, TB)
    n_tiles = B_pad // TB

    if B_pad != B:
        x = jnp.pad(x, ((0, B_pad - B), (0, 0)))

    # One-time wrapper-side casts (no per-grid-step weight casts in the kernel).
    x_mm = x.astype(md)
    w1_mm = w1.astype(md)
    w2_mm = w2.astype(md)

    # ---- explicit VMEM budget -------------------------------------------------
    isz = md.itemsize
    wbuf = 1 if single_buffer_weights else 2
    weight_bytes = wbuf * ((input_dim * hidden + hidden * hidden) * isz
                           + 3 * hidden * 4)                      # w1,w2 + b1,b2,w3
    x_tile_bytes = TB * input_dim * isz
    out_tile_bytes = TB * 4
    act_bytes = 3 * TB * hidden * 4                               # h1, h2, h1-cast
    vmem_bytes = weight_bytes + 2 * (x_tile_bytes + out_tile_bytes) + act_bytes
    vmem_bytes = int(min(max(vmem_bytes + (4 << 20), 32 << 20), 100 << 20))

    flops = 2 * B_pad * (input_dim * hidden + hidden * hidden + hidden)
    bytes_accessed = int(B_pad * input_dim * isz + B_pad * 4
                         + (input_dim * hidden + hidden * hidden) * isz
                         + 3 * hidden * 4 + 4)

    # Constant-index_map blocks: single buffer (halves w2 residency) if allowed.
    resident = {"pipeline_mode": pl.Buffered(1)} if single_buffer_weights else {}

    out = pl.pallas_call(
        _critic_kernel,
        out_shape=jax.ShapeDtypeStruct((1, B_pad), jnp.float32),
        grid=(n_tiles,),
        in_specs=[
            pl.BlockSpec((TB, input_dim), lambda i: (i, 0)),              # x streams
            pl.BlockSpec((input_dim, hidden), lambda i: (0, 0), **resident),
            pl.BlockSpec((1, hidden), lambda i: (0, 0), **resident),
            pl.BlockSpec((hidden, hidden), lambda i: (0, 0), **resident),
            pl.BlockSpec((1, hidden), lambda i: (0, 0), **resident),
            pl.BlockSpec((1, hidden), lambda i: (0, 0), **resident),
            pl.BlockSpec(memory_space=pltpu.MemorySpace.SMEM),            # b3 scalar
        ],
        out_specs=pl.BlockSpec((1, TB), lambda i: (0, i)),                # lane-dense
        compiler_params=pltpu.CompilerParams(
            dimension_semantics=("parallel",),     # megacore sharding on v7x
            vmem_limit_bytes=vmem_bytes,
        ),
        cost_estimate=pl.CostEstimate(
            flops=flops, transcendentals=0, bytes_accessed=bytes_accessed),
    )(x_mm, w1_mm, b1, w2_mm, b2, w3, b3)

    return out.reshape(B_pad, 1)[:B]


def init_critic_params(key, input_dim, hidden_size, init_w=0.003):
    """Deterministic re-implementation of Critic.__init__ / init_weigths.

    PyTorch stores Linear weight as (out, in); fanin_init uses size[0]
    (= out_features) as fan-in, reproduced faithfully. fc1/fc2 are transposed
    to (in, out) for the kernel's x @ W convention; w3 keeps the (1, hidden) row.
    """
    ks = jax.random.split(key, 6)

    def uniform(k, shape, bound):
        return jax.random.uniform(k, shape, jnp.float32, -bound, bound)

    w1_t = uniform(ks[0], (hidden_size, input_dim), 1.0 / jnp.sqrt(hidden_size))
    b1 = uniform(ks[1], (1, hidden_size), 1.0 / jnp.sqrt(input_dim))
    w2_t = uniform(ks[2], (hidden_size, hidden_size), 1.0 / jnp.sqrt(hidden_size))
    b2 = uniform(ks[3], (1, hidden_size), 1.0 / jnp.sqrt(hidden_size))
    w3_row = uniform(ks[4], (1, hidden_size), init_w)
    b3 = uniform(ks[5], (1, 1), 1.0 / jnp.sqrt(hidden_size))

    return (w1_t.T, b1, w2_t.T, b2, w3_row, b3)


def _reference_forward(x, w1, b1, w2, b2, w3, b3):
    h1 = jnp.maximum(x @ w1 + b1, 0.0)
    h2 = jnp.maximum(h1 @ w2 + b2, 0.0)
    return h2 @ w3.T + b3


if __name__ == "__main__":
    key = jax.random.PRNGKey(0)
    k_x, k_x2, k_p = jax.random.split(key, 3)

    batch = 8
    input_dim = 16
    hidden_size = 32

    x = jax.random.normal(k_x, (batch, input_dim), dtype=jnp.float32)
    params = init_critic_params(k_p, input_dim, hidden_size, init_w=0.003)
    ref = _reference_forward(x, *params)

    # Probe single-buffered resident weights; fall back to default buffering if
    # this jax build rejects pl.Buffered(1).
    try:
        value = jax.block_until_ready(
            critic_forward(x, *params, single_buffer_weights=True))
        sb = True
    except Exception:
        sb = False
        value = jax.block_until_ready(
            critic_forward(x, *params, single_buffer_weights=False))

    # f32 path (exact vs reference)
    assert value.shape == (batch, 1), value.shape
    assert jnp.allclose(value, ref, atol=1e-5, rtol=1e-5), "f32 mismatch vs reference"

    # bf16-MXU path (recommended on v5e/v6e/v7x; f32 accumulation) — loose tol.
    value_bf16 = jax.block_until_ready(
        critic_forward(x, *params, matmul_dtype="bfloat16",
                       single_buffer_weights=sb))
    assert value_bf16.shape == (batch, 1), value_bf16.shape
    assert jnp.allclose(value_bf16, ref, atol=1e-2, rtol=5e-2), "bf16 mismatch"

    # Multi-tile grid path (n_tiles >= 2, exercises the "parallel" batch axis
    # and lane-dense block indexing).
    batch2 = 300
    x2 = jax.random.normal(k_x2, (batch2, input_dim), dtype=jnp.float32)
    ref2 = _reference_forward(x2, *params)
    value2 = jax.block_until_ready(
        critic_forward(x2, *params, single_buffer_weights=sb))
    assert value2.shape == (batch2, 1), value2.shape
    assert jnp.allclose(value2, ref2, atol=1e-5, rtol=1e-5), "multi-tile mismatch"

    print("KERNEL_OK")
</pallas_src>

<mosaic_0001>
module attributes {stable_mosaic.version = 11 : i64} {
  func.func @_critic_kernel(%arg0: i32, %arg1: memref<128x16xf32, #tpu.memory_space<vmem>>, %arg2: memref<16x32xf32, #tpu.memory_space<vmem>>, %arg3: memref<1x32xf32, #tpu.memory_space<vmem>>, %arg4: memref<32x32xf32, #tpu.memory_space<vmem>>, %arg5: memref<1x32xf32, #tpu.memory_space<vmem>>, %arg6: memref<1x32xf32, #tpu.memory_space<vmem>>, %arg7: memref<1x1xf32, #tpu.memory_space<smem>>, %arg8: memref<1x128xf32, #tpu.memory_space<vmem>>) attributes {dimension_semantics = [#tpu.dimension_semantics<parallel>], iteration_bounds = array<i64: 1>, scalar_prefetch = 0 : i64, scratch_operands = 0 : i64, tpu.core_type = #tpu.core_type<tc>, window_params = [{transform_indices = @transform_0, window_bounds = array<i64: 128, 16>}, {pipeline_mode = #tpu.pipeline_mode<synchronous>, transform_indices = @transform_1, window_bounds = array<i64: 16, 32>}, {pipeline_mode = #tpu.pipeline_mode<synchronous>, transform_indices = @transform_2, window_bounds = array<i64: 1, 32>}, {pipeline_mode = #tpu.pipeline_mode<synchronous>, transform_indices = @transform_3, window_bounds = array<i64: 32, 32>}, {pipeline_mode = #tpu.pipeline_mode<synchronous>, transform_indices = @transform_4, window_bounds = array<i64: 1, 32>}, {pipeline_mode = #tpu.pipeline_mode<synchronous>, transform_indices = @transform_5, window_bounds = array<i64: 1, 32>}, {transform_indices = @transform_6, window_bounds = array<i64: 1, 1>}, {transform_indices = @transform_7, window_bounds = array<i64: 1, 128>}]} {
    %c0 = arith.constant 0 : index
    %c0_0 = arith.constant 0 : index
    %0 = vector.load %arg1[%c0, %c0_0] : memref<128x16xf32, #tpu.memory_space<vmem>>, vector<128x16xf32>
    %c0_1 = arith.constant 0 : index
    %c0_2 = arith.constant 0 : index
    %1 = vector.load %arg2[%c0_1, %c0_2] : memref<16x32xf32, #tpu.memory_space<vmem>>, vector<16x32xf32>
    %cst = arith.constant dense<0.000000e+00> : vector<128x32xf32>
    %2 = tpu.matmul %0, %1, %cst {dimension_numbers = #tpu.dot_dimension_numbers<[1], [0], [0], [1], [0, 0, 1, 1], [], []>} : vector<128x16xf32>, vector<16x32xf32>, vector<128x32xf32> -> vector<128x32xf32>
    %c0_3 = arith.constant 0 : index
    %c0_4 = arith.constant 0 : index
    %3 = vector.load %arg3[%c0_3, %c0_4] : memref<1x32xf32, #tpu.memory_space<vmem>>, vector<1x32xf32>
    %4 = vector.broadcast %3 : vector<1x32xf32> to vector<128x32xf32>
    %5 = arith.addf %2, %4 : vector<128x32xf32>
    %cst_5 = arith.constant 0.000000e+00 : f32
    %6 = vector.broadcast %cst_5 : f32 to vector<128x32xf32>
    %7 = arith.maximumf %5, %6 : vector<128x32xf32>
    %c0_6 = arith.constant 0 : index
    %c0_7 = arith.constant 0 : index
    %8 = vector.load %arg4[%c0_6, %c0_7] : memref<32x32xf32, #tpu.memory_space<vmem>>, vector<32x32xf32>
    %cst_8 = arith.constant dense<0.000000e+00> : vector<128x32xf32>
    %9 = tpu.matmul %7, %8, %cst_8 {dimension_numbers = #tpu.dot_dimension_numbers<[1], [0], [0], [1], [0, 0, 1, 1], [], []>} : vector<128x32xf32>, vector<32x32xf32>, vector<128x32xf32> -> vector<128x32xf32>
    %c0_9 = arith.constant 0 : index
    %c0_10 = arith.constant 0 : index
    %10 = vector.load %arg5[%c0_9, %c0_10] : memref<1x32xf32, #tpu.memory_space<vmem>>, vector<1x32xf32>
    %11 = vector.broadcast %10 : vector<1x32xf32> to vector<128x32xf32>
    %12 = arith.addf %9, %11 : vector<128x32xf32>
    %cst_11 = arith.constant 0.000000e+00 : f32
    %13 = vector.broadcast %cst_11 : f32 to vector<128x32xf32>
    %14 = arith.maximumf %12, %13 : vector<128x32xf32>
    %c0_12 = arith.constant 0 : index
    %c0_13 = arith.constant 0 : index
    %15 = vector.load %arg6[%c0_12, %c0_13] : memref<1x32xf32, #tpu.memory_space<vmem>>, vector<1x32xf32>
    %16 = vector.broadcast %15 : vector<1x32xf32> to vector<128x32xf32>
    %17 = arith.mulf %14, %16 : vector<128x32xf32>
    %cst_14 = arith.constant dense<0.000000e+00> : vector<128xf32>
    %18 = vector.multi_reduction <add>, %17, %cst_14 [1] : vector<128x32xf32> to vector<128xf32>
    %19 = vector.shape_cast %18 : vector<128xf32> to vector<1x128xf32>
    %c0_15 = arith.constant 0 : index
    %c0_16 = arith.constant 0 : index
    %20 = memref.load %arg7[%c0_15, %c0_16] : memref<1x1xf32, #tpu.memory_space<smem>>
    %21 = vector.broadcast %20 : f32 to vector<1x128xf32>
    %22 = arith.addf %19, %21 : vector<1x128xf32>
    %c0_17 = arith.constant 0 : index
    %c0_18 = arith.constant 0 : index
    %23 = vector.load %arg8[%c0_17, %c0_18] : memref<1x128xf32, #tpu.memory_space<vmem>>, vector<1x128xf32>
    tpu.vector_store %arg8[%c0_17, %c0_18], %22 {strides = array<i32>} : memref<1x128xf32, #tpu.memory_space<vmem>>, vector<1x128xf32>,
    return
  }
  func.func @transform_0(%arg0: i32) -> (i32, i32) {
    %c0_i32 = arith.constant 0 : i32
    %c0_i32_0 = arith.constant 0 : i32
    return %arg0, %c0_i32 : i32, i32
  }
  func.func @transform_1(%arg0: i32) -> (i32, i32) {
    %c0_i32 = arith.constant 0 : i32
    %c0_i32_0 = arith.constant 0 : i32
    %c0_i32_1 = arith.constant 0 : i32
    return %c0_i32, %c0_i32_0 : i32, i32
  }
  func.func @transform_2(%arg0: i32) -> (i32, i32) {
    %c0_i32 = arith.constant 0 : i32
    %c0_i32_0 = arith.constant 0 : i32
    %c0_i32_1 = arith.constant 0 : i32
    return %c0_i32, %c0_i32_0 : i32, i32
  }
  func.func @transform_3(%arg0: i32) -> (i32, i32) {
    %c0_i32 = arith.constant 0 : i32
    %c0_i32_0 = arith.constant 0 : i32
    %c0_i32_1 = arith.constant 0 : i32
    return %c0_i32, %c0_i32_0 : i32, i32
  }
  func.func @transform_4(%arg0: i32) -> (i32, i32) {
    %c0_i32 = arith.constant 0 : i32
    %c0_i32_0 = arith.constant 0 : i32
    %c0_i32_1 = arith.constant 0 : i32
    return %c0_i32, %c0_i32_0 : i32, i32
  }
  func.func @transform_5(%arg0: i32) -> (i32, i32) {
    %c0_i32 = arith.constant 0 : i32
    %c0_i32_0 = arith.constant 0 : i32
    %c0_i32_1 = arith.constant 0 : i32
    return %c0_i32, %c0_i32_0 : i32, i32
  }
  func.func @transform_6(%arg0: i32) -> (i32, i32) {
    %c0_i32 = arith.constant 0 : i32
    %c0_i32_0 = arith.constant 0 : i32
    %c0_i32_1 = arith.constant 0 : i32
    return %c0_i32, %c0_i32_0 : i32, i32
  }
  func.func @transform_7(%arg0: i32) -> (i32, i32) {
    %c0_i32 = arith.constant 0 : i32
    %c0_i32_0 = arith.constant 0 : i32
    return %c0_i32, %arg0 : i32, i32
  }
}

module attributes {stable_mosaic.version = 11 : i64} {
  func.func @_critic_kernel(%arg0: i32, %arg1: memref<128x16xf32, #tpu.memory_space<vmem>>, %arg2: memref<16x32xf32, #tpu.memory_space<vmem>>, %arg3: memref<1x32xf32, #tpu.memory_space<vmem>>, %arg4: memref<32x32xf32, #tpu.memory_space<vmem>>, %arg5: memref<1x32xf32, #tpu.memory_space<vmem>>, %arg6: memref<1x32xf32, #tpu.memory_space<vmem>>, %arg7: memref<1x1xf32, #tpu.memory_space<smem>>, %arg8: memref<1x128xf32, #tpu.memory_space<vmem>>) attributes {dimension_semantics = [#tpu.dimension_semantics<parallel>], iteration_bounds = array<i64: 1>, scalar_prefetch = 0 : i64, scratch_operands = 0 : i64, tpu.core_type = #tpu.core_type<tc>, window_params = [{transform_indices = @transform_0, window_bounds = array<i64: 128, 16>}, {pipeline_mode = #tpu.pipeline_mode<synchronous>, transform_indices = @transform_1, window_bounds = array<i64: 16, 32>}, {pipeline_mode = #tpu.pipeline_mode<synchronous>, transform_indices = @transform_2, window_bounds = array<i64: 1, 32>}, {pipeline_mode = #tpu.pipeline_mode<synchronous>, transform_indices = @transform_3, window_bounds = array<i64: 32, 32>}, {pipeline_mode = #tpu.pipeline_mode<synchronous>, transform_indices = @transform_4, window_bounds = array<i64: 1, 32>}, {pipeline_mode = #tpu.pipeline_mode<synchronous>, transform_indices = @transform_5, window_bounds = array<i64: 1, 32>}, {transform_indices = @transform_6, window_bounds = array<i64: 1, 1>}, {transform_indices = @transform_7, window_bounds = array<i64: 1, 128>}]} {
    %c0 = arith.constant 0 : index
    %c0_0 = arith.constant 0 : index
    %0 = vector.load %arg1[%c0, %c0_0] : memref<128x16xf32, #tpu.memory_space<vmem>>, vector<128x16xf32>
    %c0_1 = arith.constant 0 : index
    %c0_2 = arith.constant 0 : index
    %1 = vector.load %arg2[%c0_1, %c0_2] : memref<16x32xf32, #tpu.memory_space<vmem>>, vector<16x32xf32>
    %cst = arith.constant dense<0.000000e+00> : vector<128x32xf32>
    %2 = tpu.matmul %0, %1, %cst {dimension_numbers = #tpu.dot_dimension_numbers<[1], [0], [0], [1], [0, 0, 1, 1], [], []>} : vector<128x16xf32>, vector<16x32xf32>, vector<128x32xf32> -> vector<128x32xf32>
    %c0_3 = arith.constant 0 : index
    %c0_4 = arith.constant 0 : index
    %3 = vector.load %arg3[%c0_3, %c0_4] : memref<1x32xf32, #tpu.memory_space<vmem>>, vector<1x32xf32>
    %4 = vector.broadcast %3 : vector<1x32xf32> to vector<128x32xf32>
    %5 = arith.addf %2, %4 : vector<128x32xf32>
    %cst_5 = arith.constant 0.000000e+00 : f32
    %6 = vector.broadcast %cst_5 : f32 to vector<128x32xf32>
    %7 = arith.maximumf %5, %6 : vector<128x32xf32>
    %c0_6 = arith.constant 0 : index
    %c0_7 = arith.constant 0 : index
    %8 = vector.load %arg4[%c0_6, %c0_7] : memref<32x32xf32, #tpu.memory_space<vmem>>, vector<32x32xf32>
    %cst_8 = arith.constant dense<0.000000e+00> : vector<128x32xf32>
    %9 = tpu.matmul %7, %8, %cst_8 {dimension_numbers = #tpu.dot_dimension_numbers<[1], [0], [0], [1], [0, 0, 1, 1], [], []>} : vector<128x32xf32>, vector<32x32xf32>, vector<128x32xf32> -> vector<128x32xf32>
    %c0_9 = arith.constant 0 : index
    %c0_10 = arith.constant 0 : index
    %10 = vector.load %arg5[%c0_9, %c0_10] : memref<1x32xf32, #tpu.memory_space<vmem>>, vector<1x32xf32>
    %11 = vector.broadcast %10 : vector<1x32xf32> to vector<128x32xf32>
    %12 = arith.addf %9, %11 : vector<128x32xf32>
    %cst_11 = arith.constant 0.000000e+00 : f32
    %13 = vector.broadcast %cst_11 : f32 to vector<128x32xf32>
    %14 = arith.maximumf %12, %13 : vector<128x32xf32>
    %c0_12 = arith.constant 0 : index
    %c0_13 = arith.constant 0 : index
    %15 = vector.load %arg6[%c0_12, %c0_13] : memref<1x32xf32, #tpu.memory_space<vmem>>, vector<1x32xf32>
    %16 = vector.broadcast %15 : vector<1x32xf32> to vector<128x32xf32>
    %17 = arith.mulf %14, %16 : vector<128x32xf32>
    %cst_14 = arith.constant dense<0.000000e+00> : vector<128xf32>
    %18 = vector.multi_reduction <add>, %17, %cst_14 [1] : vector<128x32xf32> to vector<128xf32>
    %19 = vector.shape_cast %18 : vector<128xf32> to vector<1x128xf32>
    %c0_15 = arith.constant 0 : index
    %c0_16 = arith.constant 0 : index
    %20 = memref.load %arg7[%c0_15, %c0_16] : memref<1x1xf32, #tpu.memory_space<smem>>
    %21 = vector.broadcast %20 : f32 to vector<1x128xf32>
    %22 = arith.addf %19, %21 : vector<1x128xf32>
    %c0_17 = arith.constant 0 : index
    %c0_18 = arith.constant 0 : index
    %23 = vector.load %arg8[%c0_17, %c0_18] : memref<1x128xf32, #tpu.memory_space<vmem>>, vector<1x128xf32>
    tpu.vector_store %arg8[%c0_17, %c0_18], %22 {strides = array<i32>} : memref<1x128xf32, #tpu.memory_space<vmem>>, vector<1x128xf32>,
    return
  }
  func.func @transform_0(%arg0: i32) -> (i32, i32) {
    %c0_i32 = arith.constant 0 : i32
    %c0_i32_0 = arith.constant 0 : i32
    return %arg0, %c0_i32 : i32, i32
  }
  func.func @transform_1(%arg0: i32) -> (i32, i32) {
    %c0_i32 = arith.constant 0 : i32
    %c0_i32_0 = arith.constant 0 : i32
    %c0_i32_1 = arith.constant 0 : i32
    return %c0_i32, %c0_i32_0 : i32, i32
  }
  func.func @transform_2(%arg0: i32) -> (i32, i32) {
    %c0_i32 = arith.constant 0 : i32
    %c0_i32_0 = arith.constant 0 : i32
    %c0_i32_1 = arith.constant 0 : i32
    return %c0_i32, %c0_i32_0 : i32, i32
  }
  func.func @transform_3(%arg0: i32) -> (i32, i32) {
    %c0_i32 = arith.constant 0 : i32
    %c0_i32_0 = arith.constant 0 : i32
    %c0_i32_1 = arith.constant 0 : i32
    return %c0_i32, %c0_i32_0 : i32, i32
  }
  func.func @transform_4(%arg0: i32) -> (i32, i32) {
    %c0_i32 = arith.constant 0 : i32
    %c0_i32_0 = arith.constant 0 : i32
    %c0_i32_1 = arith.constant 0 : i32
    return %c0_i32, %c0_i32_0 : i32, i32
  }
  func.func @transform_5(%arg0: i32) -> (i32, i32) {
    %c0_i32 = arith.constant 0 : i32
    %c0_i32_0 = arith.constant 0 : i32
    %c0_i32_1 = arith.constant 0 : i32
    return %c0_i32, %c0_i32_0 : i32, i32
  }
  func.func @transform_6(%arg0: i32) -> (i32, i32) {
    %c0_i32 = arith.constant 0 : i32
    %c0_i32_0 = arith.constant 0 : i32
    %c0_i32_1 = arith.constant 0 : i32
    return %c0_i32, %c0_i32_0 : i32, i32
  }
  func.func @transform_7(%arg0: i32) -> (i32, i32) {
    %c0_i32 = arith.constant 0 : i32
    %c0_i32_0 = arith.constant 0 : i32
    return %c0_i32, %arg0 : i32, i32
  }
}

</mosaic_0001>

<llo_original>
// kernel: critic_forward.1
$region0: #{critic_forward.1}
  #allocation0 [shape = 'u32[]', space=smem, size = 0x4, offset = 0x4, fixed_abs, tag = 'smem constant byte address 0x4 - core index']
  #allocation1 [shape = 'u32[144,128]{1,0:T(1,128)}', space=vmem, size = 0x12000, scoped, tag = 'internal scratch']
  #allocation2 [shape = 'f32[1,1]{1,0:T(1,128)S(6)}', space=smem, size = 0x200, scoped, tag = 'scoped memory for critic_forward.1']
  %s0 = inlined_call_operand.vmem [shape: f32[128,16], index: 0, kind: input, shape index: {}]
  %s1 = inlined_call_operand.vmem [shape: f32[16,32], index: 1, kind: input, shape index: {}]
  %s2 = inlined_call_operand.vmem [shape: f32[1,32], index: 2, kind: input, shape index: {}]
  %s3 = inlined_call_operand.vmem [shape: f32[32,32], index: 3, kind: input, shape index: {}]
  %s4 = inlined_call_operand.vmem [shape: f32[1,32], index: 4, kind: input, shape index: {}]
  %s5 = inlined_call_operand.vmem [shape: f32[1,32], index: 5, kind: input, shape index: {}]
  %s6 = inlined_call_operand.<no memory space> [shape: f32[1,1], index: 6, kind: input, shape index: {}]
  %s7 = inlined_call_operand.vmem [shape: f32[1,128], index: 7, kind: output, shape index: {}]
  %s8 = sld [smem:[#allocation0]]
  $region38: #{critic_forward.1} parent=0
    _
  %s10 = ssub.s32 1, %s8
  %s11 = scalar_select 0, %s10, %s8
  %12 = sst [smem:[#allocation2]] %s6
  // Predicated region
  $region2: #{critic_forward.1} parent=0 // pred_check
    _
  $region3: #{critic_forward.1} parent=0 // pred_check_branch
    %14 = sbr.rel (0) target = $region5
  $region4: #{critic_forward.1} parent=0 // pred_region
    _
  $region5: #{critic_forward.1} parent=0 // pred_fallthru
    _
  // Predicated region
  $region6: #{critic_forward.1} parent=0 // pred_check
    _
  $region7: #{critic_forward.1} parent=0 // pred_check_branch
    %16 = sbr.rel (0) target = $region9
  $region8: #{critic_forward.1} parent=0 // pred_region
    _
  $region9: #{critic_forward.1} parent=0 // pred_fallthru
    _
  // Predicated region
  $region10: #{critic_forward.1} parent=0 // pred_check
    _
  $region11: #{critic_forward.1} parent=0 // pred_check_branch
    %18 = sbr.rel (0) target = $region13
  $region12: #{critic_forward.1} parent=0 // pred_region
    _
  $region13: #{critic_forward.1} parent=0 // pred_fallthru
    _
  // Predicated region
  $region14: #{critic_forward.1} parent=0 // pred_check
    _
  $region15: #{critic_forward.1} parent=0 // pred_check_branch
    %20 = sbr.rel (0) target = $region17
  $region16: #{critic_forward.1} parent=0 // pred_region
    _
  $region17: #{critic_forward.1} parent=0 // pred_fallthru
    _
  // Predicated region
  $region18: #{critic_forward.1} parent=0 // pred_check
    _
  $region19: #{critic_forward.1} parent=0 // pred_check_branch
    %22 = sbr.rel (0) target = $region21
  $region20: #{critic_forward.1} parent=0 // pred_region
    _
  $region21: #{critic_forward.1} parent=0 // pred_fallthru
    _
  // Predicated region
  $region22: #{critic_forward.1} parent=0 // pred_check
    _
  $region23: #{critic_forward.1} parent=0 // pred_check_branch
    %24 = sbr.rel (0) target = $region25
  $region24: #{critic_forward.1} parent=0 // pred_region
    _
  $region25: #{critic_forward.1} parent=0 // pred_fallthru
    _
  // Predicated region
  $region26: #{critic_forward.1} parent=0 // pred_check
    _
  $region27: #{critic_forward.1} parent=0 // pred_check_branch
    %26 = sbr.rel (0) target = $region29
  $region28: #{critic_forward.1} parent=0 // pred_region
    _
  $region29: #{critic_forward.1} parent=0 // pred_fallthru
    _
  %v27 = vld [vmem:[%s0] sm:$0xff]
  %v28 = vld [vmem:[%s0 + $0x8] sm:$0xff]
  %v29 = vld [vmem:[%s0 + $0x10] sm:$0xff]
  %v30 = vld [vmem:[%s0 + $0x18] sm:$0xff]
  %v31 = vld [vmem:[%s0 + $0x20] sm:$0xff]
  %v32 = vld [vmem:[%s0 + $0x28] sm:$0xff]
  %v33 = vld [vmem:[%s0 + $0x30] sm:$0xff]
  %v34 = vld [vmem:[%s0 + $0x38] sm:$0xff]
  %v35 = vld [vmem:[%s0 + $0x40] sm:$0xff]
  %v36 = vld [vmem:[%s0 + $0x48] sm:$0xff]
  %v37 = vld [vmem:[%s0 + $0x50] sm:$0xff]
  %v38 = vld [vmem:[%s0 + $0x58] sm:$0xff]
  %v39 = vld [vmem:[%s0 + $0x60] sm:$0xff]
  %v40 = vld [vmem:[%s0 + $0x68] sm:$0xff]
  %v41 = vld [vmem:[%s0 + $0x70] sm:$0xff]
  %v42 = vld [vmem:[%s0 + $0x78] sm:$0xff]
  %v43 = vld [vmem:[%s1] sm:$0xff]
  %v44 = vld [vmem:[%s1 + $0x8] sm:$0xff]
  %v45 = vld [vmem:[%s2] sm:$0x1]
  %v47 = vlaneseq
  %v48 = vshrl.u32 %v47, 7
  %v49 = vsub.s32 0, %v48
  %v50 = vrot.slane %v45, %v49
  %vm52 = vcmask 130048
  %v54 = vsel %vm52, %v27, 0
  %v57 = vsel %vm52, %v28, 0
  %v60 = vsel %vm52, %v29, 0
  %v63 = vsel %vm52, %v30, 0
  %v66 = vsel %vm52, %v31, 0
  %v69 = vsel %vm52, %v32, 0
  %v72 = vsel %vm52, %v33, 0
  %v75 = vsel %vm52, %v34, 0
  %v78 = vsel %vm52, %v35, 0
  %v81 = vsel %vm52, %v36, 0
  %v84 = vsel %vm52, %v37, 0
  %v87 = vsel %vm52, %v38, 0
  %v90 = vsel %vm52, %v39, 0
  %v93 = vsel %vm52, %v40, 0
  %v96 = vsel %vm52, %v41, 0
  %v99 = vsel %vm52, %v42, 0
  %101 = vmatprep.subr.mxu0 0.0
  %102 = vmatpush1.msra.mxu0 0.0
  %103 = vmatprep.subr.mxu0 0.0
  %104 = vmatpush1.msra.mxu0 0.0
  %105 = vmatprep.subr.mxu0 0.0
  %106 = vmatpush1.msra.mxu0 0.0
  %107 = vmatprep.subr.mxu0 0.0
  %108 = vmatpush1.msra.mxu0 0.0
  %109 = vmatprep.subr.mxu0 0.0
  %110 = vmatpush1.msra.mxu0 0.0
  %111 = vmatprep.subr.mxu0 0.0
  %112 = vmatpush1.msra.mxu0 0.0
  %113 = vmatprep.subr.mxu0 0.0
  %114 = vmatpush1.msra.mxu0 0.0
  %115 = vmatprep.subr.mxu0 0.0
  %116 = vmatpush1.msra.mxu0 0.0
  %117 = vmatprep.subr.mxu0 0.0
  %118 = vmatpush1.msra.mxu0 0.0
  %119 = vmatprep.subr.mxu0 0.0
  %120 = vmatpush1.msra.mxu0 0.0
  %121 = vmatprep.subr.mxu0 0.0
  %122 = vmatpush1.msra.mxu0 0.0
  %123 = vmatprep.subr.mxu0 0.0
  %124 = vmatpush1.msra.mxu0 0.0
  %125 = vmatprep.subr.mxu0 0.0
  %126 = vmatpush1.msra.mxu0 0.0
  %127 = vmatprep.subr.mxu0 0.0
  %128 = vmatpush1.msra.mxu0 0.0
  %129 = vmatprep.subr.mxu0 0.0
  %130 = vmatpush1.msra.mxu0 %v44
  %131 = vmatprep.subr.mxu0 0.0
  %132 = vmatpush1.msra.mxu0 %v43
  %133 = vmatprep.subr.mxu0 0.0
  %134 = vmatpush2.msra.mxu0 0.0
  %135 = vmatprep.subr.mxu0 0.0
  %136 = vmatpush2.msra.mxu0 0.0
  %137 = vmatprep.subr.mxu0 0.0
  %138 = vmatpush2.msra.mxu0 0.0
  %139 = vmatprep.subr.mxu0 0.0
  %140 = vmatpush2.msra.mxu0 0.0
  %141 = vmatprep.subr.mxu0 0.0
  %142 = vmatpush2.msra.mxu0 0.0
  %143 = vmatprep.subr.mxu0 0.0
  %144 = vmatpush2.msra.mxu0 0.0
  %145 = vmatprep.subr.mxu0 0.0
  %146 = vmatpush2.msra.mxu0 0.0
  %147 = vmatprep.subr.mxu0 0.0
  %148 = vmatpush2.msra.mxu0 0.0
  %149 = vmatprep.subr.mxu0 0.0
  %150 = vmatpush2.msra.mxu0 0.0
  %151 = vmatprep.subr.mxu0 0.0
  %152 = vmatpush2.msra.mxu0 0.0
  %153 = vmatprep.subr.mxu0 0.0
  %154 = vmatpush2.msra.mxu0 0.0
  %155 = vmatprep.subr.mxu0 0.0
  %156 = vmatpush2.msra.mxu0 0.0
  %157 = vmatprep.subr.mxu0 0.0
  %158 = vmatpush2.msra.mxu0 0.0
  %159 = vmatprep.subr.mxu0 0.0
  %160 = vmatpush2.msra.mxu0 0.0
  %161 = vmatprep.subr.mxu0 0.0
  %162 = vmatpush2.msra.mxu0 0.0
  %163 = vmatprep.subr.mxu0 0.0
  %164 = vmatpush2.msra.mxu0 0.0
  %165 = vmatprep.mubr.f32.mxu0 0.0
  %166 = vmatmul.mubr.f32.gmra.mxu0 %v54
  %v167 = vpop.f32.mrf.mxu0
  %v168 = vadd.f32 %v50, %v167
  %v169 = vpop.f32.mrf.mxu0
  %170 = vmatprep.mubr.f32.mxu0 0.0
  %171 = vmatmul.mubr.f32.gmra.mxu0 %v57
  %v172 = vpop.f32.mrf.mxu0
  %v173 = vadd.f32 %v50, %v172
  %v174 = vpop.f32.mrf.mxu0
  %175 = vmatprep.mubr.f32.mxu0 0.0
  %176 = vmatmul.mubr.f32.gmra.mxu0 %v60
  %v177 = vpop.f32.mrf.mxu0
  %v178 = vadd.f32 %v50, %v177
  %v179 = vpop.f32.mrf.mxu0
  %180 = vmatprep.mubr.f32.mxu0 0.0
  %181 = vmatmul.mubr.f32.gmra.mxu0 %v63
  %v182 = vpop.f32.mrf.mxu0
  %v183 = vadd.f32 %v50, %v182
  %v184 = vpop.f32.mrf.mxu0
  %185 = vmatprep.mubr.f32.mxu0 0.0
  %186 = vmatmul.mubr.f32.gmra.mxu0 %v66
  %v187 = vpop.f32.mrf.mxu0
  %v188 = vadd.f32 %v50, %v187
  %v189 = vpop.f32.mrf.mxu0
  %190 = vmatprep.mubr.f32.mxu0 0.0
  %191 = vmatmul.mubr.f32.gmra.mxu0 %v69
  %v192 = vpop.f32.mrf.mxu0
  %v193 = vadd.f32 %v50, %v192
  %v194 = vpop.f32.mrf.mxu0
  %195 = vmatprep.mubr.f32.mxu0 0.0
  %196 = vmatmul.mubr.f32.gmra.mxu0 %v72
  %v197 = vpop.f32.mrf.mxu0
  %v198 = vadd.f32 %v50, %v197
  %v199 = vpop.f32.mrf.mxu0
  %200 = vmatprep.mubr.f32.mxu0 0.0
  %201 = vmatmul.mubr.f32.gmra.mxu0 %v75
  %v202 = vpop.f32.mrf.mxu0
  %v203 = vadd.f32 %v50, %v202
  %v204 = vpop.f32.mrf.mxu0
  %205 = vmatprep.mubr.f32.mxu0 0.0
  %206 = vmatmul.mubr.f32.gmra.mxu0 %v78
  %v207 = vpop.f32.mrf.mxu0
  %v208 = vadd.f32 %v50, %v207
  %v209 = vpop.f32.mrf.mxu0
  %210 = vmatprep.mubr.f32.mxu0 0.0
  %211 = vmatmul.mubr.f32.gmra.mxu0 %v81
  %v212 = vpop.f32.mrf.mxu0
  %v213 = vadd.f32 %v50, %v212
  %v214 = vpop.f32.mrf.mxu0
  %215 = vmatprep.mubr.f32.mxu0 0.0
  %216 = vmatmul.mubr.f32.gmra.mxu0 %v84
  %v217 = vpop.f32.mrf.mxu0
  %v218 = vadd.f32 %v50, %v217
  %v219 = vpop.f32.mrf.mxu0
  %220 = vmatprep.mubr.f32.mxu0 0.0
  %221 = vmatmul.mubr.f32.gmra.mxu0 %v87
  %v222 = vpop.f32.mrf.mxu0
  %v223 = vadd.f32 %v50, %v222
  %v224 = vpop.f32.mrf.mxu0
  %225 = vmatprep.mubr.f32.mxu0 0.0
  %226 = vmatmul.mubr.f32.gmra.mxu0 %v90
  %v227 = vpop.f32.mrf.mxu0
  %v228 = vadd.f32 %v50, %v227
  %v229 = vpop.f32.mrf.mxu0
  %230 = vmatprep.mubr.f32.mxu0 0.0
  %231 = vmatmul.mubr.f32.gmra.mxu0 %v93
  %v232 = vpop.f32.mrf.mxu0
  %v233 = vadd.f32 %v50, %v232
  %v234 = vpop.f32.mrf.mxu0
  %235 = vmatprep.mubr.f32.mxu0 0.0
  %236 = vmatmul.mubr.f32.gmra.mxu0 %v96
  %v237 = vpop.f32.mrf.mxu0
  %v238 = vadd.f32 %v50, %v237
  %v239 = vpop.f32.mrf.mxu0
  %240 = vmatprep.mubr.f32.mxu0 0.0
  %241 = vmatmul.mubr.f32.gmra.mxu0 %v99
  %v242 = vpop.f32.mrf.mxu0
  %v243 = vadd.f32 %v50, %v242
  %v244 = vpop.f32.mrf.mxu0
  %245 = vdwg.mxu0
  %v246 = vmax.f32 %v168, 0.0
  %v247 = vmax.f32 %v173, 0.0
  %v248 = vmax.f32 %v178, 0.0
  %v249 = vmax.f32 %v183, 0.0
  %v250 = vmax.f32 %v188, 0.0
  %v251 = vmax.f32 %v193, 0.0
  %v252 = vmax.f32 %v198, 0.0
  %v253 = vmax.f32 %v203, 0.0
  %v254 = vmax.f32 %v208, 0.0
  %v255 = vmax.f32 %v213, 0.0
  %v256 = vmax.f32 %v218, 0.0
  %v257 = vmax.f32 %v223, 0.0
  %v258 = vmax.f32 %v228, 0.0
  %v259 = vmax.f32 %v233, 0.0
  %v260 = vmax.f32 %v238, 0.0
  %v261 = vmax.f32 %v243, 0.0
  %v262 = vld [vmem:[%s3] sm:$0xff]
  %v263 = vld [vmem:[%s3 + $0x8] sm:$0xff]
  %v264 = vld [vmem:[%s3 + $0x10] sm:$0xff]
  %v265 = vld [vmem:[%s3 + $0x18] sm:$0xff]
  %v266 = vld [vmem:[%s4] sm:$0x1]
  %v268 = vlaneseq
  %v269 = vshrl.u32 %v268, 7
  %v270 = vsub.s32 0, %v269
  %v271 = vrot.slane %v266, %v270
  %vm273 = vcmask 261120
  %v275 = vsel %vm273, %v246, 0
  %v278 = vsel %vm273, %v247, 0
  %v281 = vsel %vm273, %v248, 0
  %v284 = vsel %vm273, %v249, 0
  %v287 = vsel %vm273, %v250, 0
  %v290 = vsel %vm273, %v251, 0
  %v293 = vsel %vm273, %v252, 0
  %v296 = vsel %vm273, %v253, 0
  %v299 = vsel %vm273, %v254, 0
  %v302 = vsel %vm273, %v255, 0
  %v305 = vsel %vm273, %v256, 0
  %v308 = vsel %vm273, %v257, 0
  %v311 = vsel %vm273, %v258, 0
  %v314 = vsel %vm273, %v259, 0
  %v317 = vsel %vm273, %v260, 0
  %v320 = vsel %vm273, %v261, 0
  %322 = vmatprep.subr.mxu0 0.0
  %323 = vmatpush1.msra.mxu0 0.0
  %324 = vmatprep.subr.mxu0 0.0
  %325 = vmatpush1.msra.mxu0 0.0
  %326 = vmatprep.subr.mxu0 0.0
  %327 = vmatpush1.msra.mxu0 0.0
  %328 = vmatprep.subr.mxu0 0.0
  %329 = vmatpush1.msra.mxu0 0.0
  %330 = vmatprep.subr.mxu0 0.0
  %331 = vmatpush1.msra.mxu0 0.0
  %332 = vmatprep.subr.mxu0 0.0
  %333 = vmatpush1.msra.mxu0 0.0
  %334 = vmatprep.subr.mxu0 0.0
  %335 = vmatpush1.msra.mxu0 0.0
  %336 = vmatprep.subr.mxu0 0.0
  %337 = vmatpush1.msra.mxu0 0.0
  %338 = vmatprep.subr.mxu0 0.0
  %339 = vmatpush1.msra.mxu0 0.0
  %340 = vmatprep.subr.mxu0 0.0
  %341 = vmatpush1.msra.mxu0 0.0
  %342 = vmatprep.subr.mxu0 0.0
  %343 = vmatpush1.msra.mxu0 0.0
  %344 = vmatprep.subr.mxu0 0.0
  %345 = vmatpush1.msra.mxu0 0.0
  %346 = vmatprep.subr.mxu0 0.0
  %347 = vmatpush1.msra.mxu0 %v265
  %348 = vmatprep.subr.mxu0 0.0
  %349 = vmatpush1.msra.mxu0 %v264
  %350 = vmatprep.subr.mxu0 0.0
  %351 = vmatpush1.msra.mxu0 %v263
  %352 = vmatprep.subr.mxu0 0.0
  %353 = vmatpush1.msra.mxu0 %v262
  %354 = vmatprep.subr.mxu0 0.0
  %355 = vmatpush2.msra.mxu0 0.0
  %356 = vmatprep.subr.mxu0 0.0
  %357 = vmatpush2.msra.mxu0 0.0
  %358 = vmatprep.subr.mxu0 0.0
  %359 = vmatpush2.msra.mxu0 0.0
  %360 = vmatprep.subr.mxu0 0.0
  %361 = vmatpush2.msra.mxu0 0.0
  %362 = vmatprep.subr.mxu0 0.0
  %363 = vmatpush2.msra.mxu0 0.0
  %364 = vmatprep.subr.mxu0 0.0
  %365 = vmatpush2.msra.mxu0 0.0
  %366 = vmatprep.subr.mxu0 0.0
  %367 = vmatpush2.msra.mxu0 0.0
  %368 = vmatprep.subr.mxu0 0.0
  %369 = vmatpush2.msra.mxu0 0.0
  %370 = vmatprep.subr.mxu0 0.0
  %371 = vmatpush2.msra.mxu0 0.0
  %372 = vmatprep.subr.mxu0 0.0
  %373 = vmatpush2.msra.mxu0 0.0
  %374 = vmatprep.subr.mxu0 0.0
  %375 = vmatpush2.msra.mxu0 0.0
  %376 = vmatprep.subr.mxu0 0.0
  %377 = vmatpush2.msra.mxu0 0.0
  %378 = vmatprep.subr.mxu0 0.0
  %379 = vmatpush2.msra.mxu0 0.0
  %380 = vmatprep.subr.mxu0 0.0
  %381 = vmatpush2.msra.mxu0 0.0
  %382 = vmatprep.subr.mxu0 0.0
  %383 = vmatpush2.msra.mxu0 0.0
  %384 = vmatprep.subr.mxu0 0.0
  %385 = vmatpush2.msra.mxu0 0.0
  %386 = vmatprep.mubr.f32.mxu0 0.0
  %387 = vmatmul.mubr.f32.gmra.mxu0 %v275
  %v388 = vpop.f32.mrf.mxu0
  %v389 = vadd.f32 %v271, %v388
  %v390 = vpop.f32.mrf.mxu0
  %391 = vmatprep.mubr.f32.mxu0 0.0
  %392 = vmatmul.mubr.f32.gmra.mxu0 %v278
  %v393 = vpop.f32.mrf.mxu0
  %v394 = vadd.f32 %v271, %v393
  %v395 = vpop.f32.mrf.mxu0
  %396 = vmatprep.mubr.f32.mxu0 0.0
  %397 = vmatmul.mubr.f32.gmra.mxu0 %v281
  %v398 = vpop.f32.mrf.mxu0
  %v399 = vadd.f32 %v271, %v398
  %v400 = vpop.f32.mrf.mxu0
  %401 = vmatprep.mubr.f32.mxu0 0.0
  %402 = vmatmul.mubr.f32.gmra.mxu0 %v284
  %v403 = vpop.f32.mrf.mxu0
  %v404 = vadd.f32 %v271, %v403
  %v405 = vpop.f32.mrf.mxu0
  %406 = vmatprep.mubr.f32.mxu0 0.0
  %407 = vmatmul.mubr.f32.gmra.mxu0 %v287
  %v408 = vpop.f32.mrf.mxu0
  %v409 = vadd.f32 %v271, %v408
  %v410 = vpop.f32.mrf.mxu0
  %411 = vmatprep.mubr.f32.mxu0 0.0
  %412 = vmatmul.mubr.f32.gmra.mxu0 %v290
  %v413 = vpop.f32.mrf.mxu0
  %v414 = vadd.f32 %v271, %v413
  %v415 = vpop.f32.mrf.mxu0
  %416 = vmatprep.mubr.f32.mxu0 0.0
  %417 = vmatmul.mubr.f32.gmra.mxu0 %v293
  %v418 = vpop.f32.mrf.mxu0
  %v419 = vadd.f32 %v271, %v418
  %v420 = vpop.f32.mrf.mxu0
  %421 = vmatprep.mubr.f32.mxu0 0.0
  %422 = vmatmul.mubr.f32.gmra.mxu0 %v296
  %v423 = vpop.f32.mrf.mxu0
  %v424 = vadd.f32 %v271, %v423
  %v425 = vpop.f32.mrf.mxu0
  %426 = vmatprep.mubr.f32.mxu0 0.0
  %427 = vmatmul.mubr.f32.gmra.mxu0 %v299
  %v428 = vpop.f32.mrf.mxu0
  %v429 = vadd.f32 %v271, %v428
  %v430 = vpop.f32.mrf.mxu0
  %431 = vmatprep.mubr.f32.mxu0 0.0
  %432 = vmatmul.mubr.f32.gmra.mxu0 %v302
  %v433 = vpop.f32.mrf.mxu0
  %v434 = vadd.f32 %v271, %v433
  %v435 = vpop.f32.mrf.mxu0
  %436 = vmatprep.mubr.f32.mxu0 0.0
  %437 = vmatmul.mubr.f32.gmra.mxu0 %v305
  %v438 = vpop.f32.mrf.mxu0
  %v439 = vadd.f32 %v271, %v438
  %v440 = vpop.f32.mrf.mxu0
  %441 = vmatprep.mubr.f32.mxu0 0.0
  %442 = vmatmul.mubr.f32.gmra.mxu0 %v308
  %v443 = vpop.f32.mrf.mxu0
  %v444 = vadd.f32 %v271, %v443
  %v445 = vpop.f32.mrf.mxu0
  %446 = vmatprep.mubr.f32.mxu0 0.0
  %447 = vmatmul.mubr.f32.gmra.mxu0 %v311
  %v448 = vpop.f32.mrf.mxu0
  %v449 = vadd.f32 %v271, %v448
  %v450 = vpop.f32.mrf.mxu0
  %451 = vmatprep.mubr.f32.mxu0 0.0
  %452 = vmatmul.mubr.f32.gmra.mxu0 %v314
  %v453 = vpop.f32.mrf.mxu0
  %v454 = vadd.f32 %v271, %v453
  %v455 = vpop.f32.mrf.mxu0
  %456 = vmatprep.mubr.f32.mxu0 0.0
  %457 = vmatmul.mubr.f32.gmra.mxu0 %v317
  %v458 = vpop.f32.mrf.mxu0
  %v459 = vadd.f32 %v271, %v458
  %v460 = vpop.f32.mrf.mxu0
  %461 = vmatprep.mubr.f32.mxu0 0.0
  %462 = vmatmul.mubr.f32.gmra.mxu0 %v320
  %v463 = vpop.f32.mrf.mxu0
  %v464 = vadd.f32 %v271, %v463
  %v465 = vpop.f32.mrf.mxu0
  %466 = vdwg.mxu0
  %v467 = vmax.f32 %v389, 0.0
  %v468 = vmax.f32 %v394, 0.0
  %v469 = vmax.f32 %v399, 0.0
  %v470 = vmax.f32 %v404, 0.0
  %v471 = vmax.f32 %v409, 0.0
  %v472 = vmax.f32 %v414, 0.0
  %v473 = vmax.f32 %v419, 0.0
  %v474 = vmax.f32 %v424, 0.0
  %v475 = vmax.f32 %v429, 0.0
  %v476 = vmax.f32 %v434, 0.0
  %v477 = vmax.f32 %v439, 0.0
  %v478 = vmax.f32 %v444, 0.0
  %v479 = vmax.f32 %v449, 0.0
  %v480 = vmax.f32 %v454, 0.0
  %v481 = vmax.f32 %v459, 0.0
  %v482 = vmax.f32 %v464, 0.0
  %v483 = vld [vmem:[%s5] sm:$0x1]
  %v485 = vlaneseq
  %v486 = vshrl.u32 %v485, 7
  %v487 = vsub.s32 0, %v486
  %v488 = vrot.slane %v483, %v487
  %v490 = vmul.f32 %v467, %v488
  %v491 = vmul.f32 %v468, %v488
  %v492 = vmul.f32 %v469, %v488
  %v493 = vmul.f32 %v470, %v488
  %v494 = vmul.f32 %v471, %v488
  %v495 = vmul.f32 %v472, %v488
  %v496 = vmul.f32 %v473, %v488
  %v497 = vmul.f32 %v474, %v488
  %v498 = vmul.f32 %v475, %v488
  %v499 = vmul.f32 %v476, %v488
  %v500 = vmul.f32 %v477, %v488
  %v501 = vmul.f32 %v478, %v488
  %v502 = vmul.f32 %v479, %v488
  %v503 = vmul.f32 %v480, %v488
  %v504 = vmul.f32 %v481, %v488
  %v505 = vmul.f32 %v482, %v488
  %v506 = vsel %vm273, %v490, 0.0
  %507 = vadd.xlane.f32.xlu0 %v506
  %v508 = vpop.xlane.xlu0 %507
  %v509 = vsel %vm273, %v491, 0.0
  %510 = vadd.xlane.f32.xlu0 %v509
  %v511 = vpop.xlane.xlu0 %510
  %v512 = vsel %vm273, %v492, 0.0
  %513 = vadd.xlane.f32.xlu0 %v512
  %v514 = vpop.xlane.xlu0 %513
  %v515 = vsel %vm273, %v493, 0.0
  %516 = vadd.xlane.f32.xlu0 %v515
  %v517 = vpop.xlane.xlu0 %516
  %v518 = vsel %vm273, %v494, 0.0
  %519 = vadd.xlane.f32.xlu0 %v518
  %v520 = vpop.xlane.xlu0 %519
  %v521 = vsel %vm273, %v495, 0.0
  %522 = vadd.xlane.f32.xlu0 %v521
  %v523 = vpop.xlane.xlu0 %522
  %v524 = vsel %vm273, %v496, 0.0
  %525 = vadd.xlane.f32.xlu0 %v524
  %v526 = vpop.xlane.xlu0 %525
  %v527 = vsel %vm273, %v497, 0.0
  %528 = vadd.xlane.f32.xlu0 %v527
  %v529 = vpop.xlane.xlu0 %528
  %v530 = vsel %vm273, %v498, 0.0
  %531 = vadd.xlane.f32.xlu0 %v530
  %v532 = vpop.xlane.xlu0 %531
  %v533 = vsel %vm273, %v499, 0.0
  %534 = vadd.xlane.f32.xlu0 %v533
  %v535 = vpop.xlane.xlu0 %534
  %v536 = vsel %vm273, %v500, 0.0
  %537 = vadd.xlane.f32.xlu0 %v536
  %v538 = vpop.xlane.xlu0 %537
  %v539 = vsel %vm273, %v501, 0.0
  %540 = vadd.xlane.f32.xlu0 %v539
  %v541 = vpop.xlane.xlu0 %540
  %v542 = vsel %vm273, %v502, 0.0
  %543 = vadd.xlane.f32.xlu0 %v542
  %v544 = vpop.xlane.xlu0 %543
  %v545 = vsel %vm273, %v503, 0.0
  %546 = vadd.xlane.f32.xlu0 %v545
  %v547 = vpop.xlane.xlu0 %546
  %v548 = vsel %vm273, %v504, 0.0
  %549 = vadd.xlane.f32.xlu0 %v548
  %v550 = vpop.xlane.xlu0 %549
  %v551 = vsel %vm273, %v505, 0.0
  %552 = vadd.xlane.f32.xlu0 %v551
  %v553 = vpop.xlane.xlu0 %552
  %s554 = sld [smem:[#allocation2]]
  %v555 = vstv %s554
  %v556 = vadd.f32 %v508, %v555
  %v557 = vadd.f32 %v511, %v555
  %v558 = vadd.f32 %v514, %v555
  %v559 = vadd.f32 %v517, %v555
  %v560 = vadd.f32 %v520, %v555
  %v561 = vadd.f32 %v523, %v555
  %v562 = vadd.f32 %v526, %v555
  %v563 = vadd.f32 %v529, %v555
  %v564 = vadd.f32 %v532, %v555
  %v565 = vadd.f32 %v535, %v555
  %v566 = vadd.f32 %v538, %v555
  %v567 = vadd.f32 %v541, %v555
  %v568 = vadd.f32 %v544, %v555
  %v569 = vadd.f32 %v547, %v555
  %v570 = vadd.f32 %v550, %v555
  %v571 = vadd.f32 %v553, %v555
  %v588 = vlaneseq
  %v589 = vand.u32 %v588, 127
  %v590 = vlaneseq
  %v591 = vshrl.u32 %v590, 7
  %v592 = vsub.s32 %v589, %v591
  %v593 = vrot.slane %v556, %v592
  %v594 = vadd.s32 %v589, 4294967288
  %v595 = vlaneseq
  %v596 = vshrl.u32 %v595, 7
  %v597 = vsub.s32 %v594, %v596
  %v598 = vrot.slane %v557, %v597
  %vm599 = vcmask 130112
  %v600 = vsel %vm599, %v598, %v593
  %v601 = vadd.s32 %v589, 4294967280
  %v602 = vlaneseq
  %v603 = vshrl.u32 %v602, 7
  %v604 = vsub.s32 %v601, %v603
  %v605 = vrot.slane %v558, %v604
  %vm606 = vcmask 195712
  %v607 = vsel %vm606, %v605, %v600
  %v608 = vadd.s32 %v589, 4294967272
  %v609 = vlaneseq
  %v610 = vshrl.u32 %v609, 7
  %v611 = vsub.s32 %v608, %v610
  %v612 = vrot.slane %v559, %v611
  %vm613 = vcmask 261312
  %v614 = vsel %vm613, %v612, %v607
  %v615 = vadd.s32 %v589, 4294967264
  %v616 = vlaneseq
  %v617 = vshrl.u32 %v616, 7
  %v618 = vsub.s32 %v615, %v617
  %v619 = vrot.slane %v560, %v618
  %vm620 = vcmask 326912
  %v621 = vsel %vm620, %v619, %v614
  %v622 = vadd.s32 %v589, 4294967256
  %v623 = vlaneseq
  %v624 = vshrl.u32 %v623, 7
  %v625 = vsub.s32 %v622, %v624
  %v626 = vrot.slane %v561, %v625
  %vm627 = vcmask 392512
  %v628 = vsel %vm627, %v626, %v621
  %v629 = vadd.s32 %v589, 4294967248
  %v630 = vlaneseq
  %v631 = vshrl.u32 %v630, 7
  %v632 = vsub.s32 %v629, %v631
  %v633 = vrot.slane %v562, %v632
  %vm634 = vcmask 458112
  %v635 = vsel %vm634, %v633, %v628
  %v636 = vadd.s32 %v589, 4294967240
  %v637 = vlaneseq
  %v638 = vshrl.u32 %v637, 7
  %v639 = vsub.s32 %v636, %v638
  %v640 = vrot.slane %v563, %v639
  %vm641 = vcmask 523712
  %v642 = vsel %vm641, %v640, %v635
  %v643 = vadd.s32 %v589, 4294967232
  %v644 = vlaneseq
  %v645 = vshrl.u32 %v644, 7
  %v646 = vsub.s32 %v643, %v645
  %v647 = vrot.slane %v564, %v646
  %vm648 = vcmask 589312
  %v649 = vsel %vm648, %v647, %v642
  %v650 = vadd.s32 %v589, 4294967224
  %v651 = vlaneseq
  %v652 = vshrl.u32 %v651, 7
  %v653 = vsub.s32 %v650, %v652
  %v654 = vrot.slane %v565, %v653
  %vm655 = vcmask 654912
  %v656 = vsel %vm655, %v654, %v649
  %v657 = vadd.s32 %v589, 4294967216
  %v658 = vlaneseq
  %v659 = vshrl.u32 %v658, 7
  %v660 = vsub.s32 %v657, %v659
  %v661 = vrot.slane %v566, %v660
  %vm662 = vcmask 720512
  %v663 = vsel %vm662, %v661, %v656
  %v664 = vadd.s32 %v589, 4294967208
  %v665 = vlaneseq
  %v666 = vshrl.u32 %v665, 7
  %v667 = vsub.s32 %v664, %v666
  %v668 = vrot.slane %v567, %v667
  %vm669 = vcmask 786112
  %v670 = vsel %vm669, %v668, %v663
  %v671 = vadd.s32 %v589, 4294967200
  %v672 = vlaneseq
  %v673 = vshrl.u32 %v672, 7
  %v674 = vsub.s32 %v671, %v673
  %v675 = vrot.slane %v568, %v674
  %vm676 = vcmask 851712
  %v677 = vsel %vm676, %v675, %v670
  %v678 = vadd.s32 %v589, 4294967192
  %v679 = vlaneseq
  %v680 = vshrl.u32 %v679, 7
  %v681 = vsub.s32 %v678, %v680
  %v682 = vrot.slane %v569, %v681
  %vm683 = vcmask 917312
  %v684 = vsel %vm683, %v682, %v677
  %v685 = vadd.s32 %v589, 4294967184
  %v686 = vlaneseq
  %v687 = vshrl.u32 %v686, 7
  %v688 = vsub.s32 %v685, %v687
  %v689 = vrot.slane %v570, %v688
  %vm690 = vcmask 982912
  %v691 = vsel %vm690, %v689, %v684
  %v692 = vadd.s32 %v589, 4294967176
  %v693 = vlaneseq
  %v694 = vshrl.u32 %v693, 7
  %v695 = vsub.s32 %v692, %v694
  %v696 = vrot.slane %v571, %v695
  %vm697 = vcmask 1048512
  %v698 = vsel %vm697, %v696, %v691
  %700 = vst [vmem:[%s7] sm:$0x1] %v698
  // Predicated region
  $region30: #{critic_forward.1} parent=0 // pred_check
    _
  $region31: #{critic_forward.1} parent=0 // pred_check_branch
    %702 = sbr.rel (0) target = $region33
  $region32: #{critic_forward.1} parent=0 // pred_region
    _
  $region33: #{critic_forward.1} parent=0 // pred_fallthru
    _
  // Predicated region
  $region34: #{critic_forward.1} parent=0 // pred_check
    _
  $region35: #{critic_forward.1} parent=0 // pred_check_branch
    %704 = sbr.rel (0) target = $region37
  $region36: #{critic_forward.1} parent=0 // pred_region
    _
  $region37: #{critic_forward.1} parent=0 // pred_fallthru
    _

// kernel: critic_forward.1
$region0: #{critic_forward.1}
  #allocation0 [shape = 'u32[]', space=smem, size = 0x4, offset = 0x4, fixed_abs, tag = 'smem constant byte address 0x4 - core index']
  #allocation1 [shape = 'u32[144,128]{1,0:T(1,128)}', space=vmem, size = 0x12000, scoped, tag = 'internal scratch']
  #allocation2 [shape = 'f32[1,1]{1,0:T(1,128)S(6)}', space=smem, size = 0x200, scoped, tag = 'scoped memory for critic_forward.1']
  %s0 = inlined_call_operand.vmem [shape: f32[128,16], index: 0, kind: input, shape index: {}]
  %s1 = inlined_call_operand.vmem [shape: f32[16,32], index: 1, kind: input, shape index: {}]
  %s2 = inlined_call_operand.vmem [shape: f32[1,32], index: 2, kind: input, shape index: {}]
  %s3 = inlined_call_operand.vmem [shape: f32[32,32], index: 3, kind: input, shape index: {}]
  %s4 = inlined_call_operand.vmem [shape: f32[1,32], index: 4, kind: input, shape index: {}]
  %s5 = inlined_call_operand.vmem [shape: f32[1,32], index: 5, kind: input, shape index: {}]
  %s6 = inlined_call_operand.<no memory space> [shape: f32[1,1], index: 6, kind: input, shape index: {}]
  %s7 = inlined_call_operand.vmem [shape: f32[1,128], index: 7, kind: output, shape index: {}]
  %s8 = sld [smem:[#allocation0]]
  $region38: #{critic_forward.1} parent=0
    _
  %s10 = ssub.s32 1, %s8
  %s11 = scalar_select 0, %s10, %s8
  %12 = sst [smem:[#allocation2]] %s6
  // Predicated region
  $region2: #{critic_forward.1} parent=0 // pred_check
    _
  $region3: #{critic_forward.1} parent=0 // pred_check_branch
    %14 = sbr.rel (0) target = $region5
  $region4: #{critic_forward.1} parent=0 // pred_region
    _
  $region5: #{critic_forward.1} parent=0 // pred_fallthru
    _
  // Predicated region
  $region6: #{critic_forward.1} parent=0 // pred_check
    _
  $region7: #{critic_forward.1} parent=0 // pred_check_branch
    %16 = sbr.rel (0) target = $region9
  $region8: #{critic_forward.1} parent=0 // pred_region
    _
  $region9: #{critic_forward.1} parent=0 // pred_fallthru
    _
  // Predicated region
  $region10: #{critic_forward.1} parent=0 // pred_check
    _
  $region11: #{critic_forward.1} parent=0 // pred_check_branch
    %18 = sbr.rel (0) target = $region13
  $region12: #{critic_forward.1} parent=0 // pred_region
    _
  $region13: #{critic_forward.1} parent=0 // pred_fallthru
    _
  // Predicated region
  $region14: #{critic_forward.1} parent=0 // pred_check
    _
  $region15: #{critic_forward.1} parent=0 // pred_check_branch
    %20 = sbr.rel (0) target = $region17
  $region16: #{critic_forward.1} parent=0 // pred_region
    _
  $region17: #{critic_forward.1} parent=0 // pred_fallthru
    _
  // Predicated region
  $region18: #{critic_forward.1} parent=0 // pred_check
    _
  $region19: #{critic_forward.1} parent=0 // pred_check_branch
    %22 = sbr.rel (0) target = $region21
  $region20: #{critic_forward.1} parent=0 // pred_region
    _
  $region21: #{critic_forward.1} parent=0 // pred_fallthru
    _
  // Predicated region
  $region22: #{critic_forward.1} parent=0 // pred_check
    _
  $region23: #{critic_forward.1} parent=0 // pred_check_branch
    %24 = sbr.rel (0) target = $region25
  $region24: #{critic_forward.1} parent=0 // pred_region
    _
  $region25: #{critic_forward.1} parent=0 // pred_fallthru
    _
  // Predicated region
  $region26: #{critic_forward.1} parent=0 // pred_check
    _
  $region27: #{critic_forward.1} parent=0 // pred_check_branch
    %26 = sbr.rel (0) target = $region29
  $region28: #{critic_forward.1} parent=0 // pred_region
    _
  $region29: #{critic_forward.1} parent=0 // pred_fallthru
    _
  %v27 = vld [vmem:[%s0] sm:$0xff]
  %v28 = vld [vmem:[%s0 + $0x8] sm:$0xff]
  %v29 = vld [vmem:[%s0 + $0x10] sm:$0xff]
  %v30 = vld [vmem:[%s0 + $0x18] sm:$0xff]
  %v31 = vld [vmem:[%s0 + $0x20] sm:$0xff]
  %v32 = vld [vmem:[%s0 + $0x28] sm:$0xff]
  %v33 = vld [vmem:[%s0 + $0x30] sm:$0xff]
  %v34 = vld [vmem:[%s0 + $0x38] sm:$0xff]
  %v35 = vld [vmem:[%s0 + $0x40] sm:$0xff]
  %v36 = vld [vmem:[%s0 + $0x48] sm:$0xff]
  %v37 = vld [vmem:[%s0 + $0x50] sm:$0xff]
  %v38 = vld [vmem:[%s0 + $0x58] sm:$0xff]
  %v39 = vld [vmem:[%s0 + $0x60] sm:$0xff]
  %v40 = vld [vmem:[%s0 + $0x68] sm:$0xff]
  %v41 = vld [vmem:[%s0 + $0x70] sm:$0xff]
  %v42 = vld [vmem:[%s0 + $0x78] sm:$0xff]
  %v43 = vld [vmem:[%s1] sm:$0xff]
  %v44 = vld [vmem:[%s1 + $0x8] sm:$0xff]
  %v45 = vld [vmem:[%s2] sm:$0x1]
  %v47 = vlaneseq
  %v48 = vshrl.u32 %v47, 7
  %v49 = vsub.s32 0, %v48
  %v50 = vrot.slane %v45, %v49
  %vm52 = vcmask 130048
  %v54 = vsel %vm52, %v27, 0
  %v57 = vsel %vm52, %v28, 0
  %v60 = vsel %vm52, %v29, 0
  %v63 = vsel %vm52, %v30, 0
  %v66 = vsel %vm52, %v31, 0
  %v69 = vsel %vm52, %v32, 0
  %v72 = vsel %vm52, %v33, 0
  %v75 = vsel %vm52, %v34, 0
  %v78 = vsel %vm52, %v35, 0
  %v81 = vsel %vm52, %v36, 0
  %v84 = vsel %vm52, %v37, 0
  %v87 = vsel %vm52, %v38, 0
  %v90 = vsel %vm52, %v39, 0
  %v93 = vsel %vm52, %v40, 0
  %v96 = vsel %vm52, %v41, 0
  %v99 = vsel %vm52, %v42, 0
  %101 = vmatprep.subr.mxu0 0.0
  %102 = vmatpush1.msra.mxu0 0.0
  %103 = vmatprep.subr.mxu0 0.0
  %104 = vmatpush1.msra.mxu0 0.0
  %105 = vmatprep.subr.mxu0 0.0
  %106 = vmatpush1.msra.mxu0 0.0
  %107 = vmatprep.subr.mxu0 0.0
  %108 = vmatpush1.msra.mxu0 0.0
  %109 = vmatprep.subr.mxu0 0.0
  %110 = vmatpush1.msra.mxu0 0.0
  %111 = vmatprep.subr.mxu0 0.0
  %112 = vmatpush1.msra.mxu0 0.0
  %113 = vmatprep.subr.mxu0 0.0
  %114 = vmatpush1.msra.mxu0 0.0
  %115 = vmatprep.subr.mxu0 0.0
  %116 = vmatpush1.msra.mxu0 0.0
  %117 = vmatprep.subr.mxu0 0.0
  %118 = vmatpush1.msra.mxu0 0.0
  %119 = vmatprep.subr.mxu0 0.0
  %120 = vmatpush1.msra.mxu0 0.0
  %121 = vmatprep.subr.mxu0 0.0
  %122 = vmatpush1.msra.mxu0 0.0
  %123 = vmatprep.subr.mxu0 0.0
  %124 = vmatpush1.msra.mxu0 0.0
  %125 = vmatprep.subr.mxu0 0.0
  %126 = vmatpush1.msra.mxu0 0.0
  %127 = vmatprep.subr.mxu0 0.0
  %128 = vmatpush1.msra.mxu0 0.0
  %129 = vmatprep.subr.mxu0 0.0
  %130 = vmatpush1.msra.mxu0 %v44
  %131 = vmatprep.subr.mxu0 0.0
  %132 = vmatpush1.msra.mxu0 %v43
  %133 = vmatprep.subr.mxu0 0.0
  %134 = vmatpush2.msra.mxu0 0.0
  %135 = vmatprep.subr.mxu0 0.0
  %136 = vmatpush2.msra.mxu0 0.0
  %137 = vmatprep.subr.mxu0 0.0
  %138 = vmatpush2.msra.mxu0 0.0
  %139 = vmatprep.subr.mxu0 0.0
  %140 = vmatpush2.msra.mxu0 0.0
  %141 = vmatprep.subr.mxu0 0.0
  %142 = vmatpush2.msra.mxu0 0.0
  %143 = vmatprep.subr.mxu0 0.0
  %144 = vmatpush2.msra.mxu0 0.0
  %145 = vmatprep.subr.mxu0 0.0
  %146 = vmatpush2.msra.mxu0 0.0
  %147 = vmatprep.subr.mxu0 0.0
  %148 = vmatpush2.msra.mxu0 0.0
  %149 = vmatprep.subr.mxu0 0.0
  %150 = vmatpush2.msra.mxu0 0.0
  %151 = vmatprep.subr.mxu0 0.0
  %152 = vmatpush2.msra.mxu0 0.0
  %153 = vmatprep.subr.mxu0 0.0
  %154 = vmatpush2.msra.mxu0 0.0
  %155 = vmatprep.subr.mxu0 0.0
  %156 = vmatpush2.msra.mxu0 0.0
  %157 = vmatprep.subr.mxu0 0.0
  %158 = vmatpush2.msra.mxu0 0.0
  %159 = vmatprep.subr.mxu0 0.0
  %160 = vmatpush2.msra.mxu0 0.0
  %161 = vmatprep.subr.mxu0 0.0
  %162 = vmatpush2.msra.mxu0 0.0
  %163 = vmatprep.subr.mxu0 0.0
  %164 = vmatpush2.msra.mxu0 0.0
  %165 = vmatprep.mubr.f32.mxu0 0.0
  %166 = vmatmul.mubr.f32.gmra.mxu0 %v54
  %v167 = vpop.f32.mrf.mxu0
  %v168 = vadd.f32 %v50, %v167
  %v169 = vpop.f32.mrf.mxu0
  %170 = vmatprep.mubr.f32.mxu0 0.0
  %171 = vmatmul.mubr.f32.gmra.mxu0 %v57
  %v172 = vpop.f32.mrf.mxu0
  %v173 = vadd.f32 %v50, %v172
  %v174 = vpop.f32.mrf.mxu0
  %175 = vmatprep.mubr.f32.mxu0 0.0
  %176 = vmatmul.mubr.f32.gmra.mxu0 %v60
  %v177 = vpop.f32.mrf.mxu0
  %v178 = vadd.f32 %v50, %v177
  %v179 = vpop.f32.mrf.mxu0
  %180 = vmatprep.mubr.f32.mxu0 0.0
  %181 = vmatmul.mubr.f32.gmra.mxu0 %v63
  %v182 = vpop.f32.mrf.mxu0
  %v183 = vadd.f32 %v50, %v182
  %v184 = vpop.f32.mrf.mxu0
  %185 = vmatprep.mubr.f32.mxu0 0.0
  %186 = vmatmul.mubr.f32.gmra.mxu0 %v66
  %v187 = vpop.f32.mrf.mxu0
  %v188 = vadd.f32 %v50, %v187
  %v189 = vpop.f32.mrf.mxu0
  %190 = vmatprep.mubr.f32.mxu0 0.0
  %191 = vmatmul.mubr.f32.gmra.mxu0 %v69
  %v192 = vpop.f32.mrf.mxu0
  %v193 = vadd.f32 %v50, %v192
  %v194 = vpop.f32.mrf.mxu0
  %195 = vmatprep.mubr.f32.mxu0 0.0
  %196 = vmatmul.mubr.f32.gmra.mxu0 %v72
  %v197 = vpop.f32.mrf.mxu0
  %v198 = vadd.f32 %v50, %v197
  %v199 = vpop.f32.mrf.mxu0
  %200 = vmatprep.mubr.f32.mxu0 0.0
  %201 = vmatmul.mubr.f32.gmra.mxu0 %v75
  %v202 = vpop.f32.mrf.mxu0
  %v203 = vadd.f32 %v50, %v202
  %v204 = vpop.f32.mrf.mxu0
  %205 = vmatprep.mubr.f32.mxu0 0.0
  %206 = vmatmul.mubr.f32.gmra.mxu0 %v78
  %v207 = vpop.f32.mrf.mxu0
  %v208 = vadd.f32 %v50, %v207
  %v209 = vpop.f32.mrf.mxu0
  %210 = vmatprep.mubr.f32.mxu0 0.0
  %211 = vmatmul.mubr.f32.gmra.mxu0 %v81
  %v212 = vpop.f32.mrf.mxu0
  %v213 = vadd.f32 %v50, %v212
  %v214 = vpop.f32.mrf.mxu0
  %215 = vmatprep.mubr.f32.mxu0 0.0
  %216 = vmatmul.mubr.f32.gmra.mxu0 %v84
  %v217 = vpop.f32.mrf.mxu0
  %v218 = vadd.f32 %v50, %v217
  %v219 = vpop.f32.mrf.mxu0
  %220 = vmatprep.mubr.f32.mxu0 0.0
  %221 = vmatmul.mubr.f32.gmra.mxu0 %v87
  %v222 = vpop.f32.mrf.mxu0
  %v223 = vadd.f32 %v50, %v222
  %v224 = vpop.f32.mrf.mxu0
  %225 = vmatprep.mubr.f32.mxu0 0.0
  %226 = vmatmul.mubr.f32.gmra.mxu0 %v90
  %v227 = vpop.f32.mrf.mxu0
  %v228 = vadd.f32 %v50, %v227
  %v229 = vpop.f32.mrf.mxu0
  %230 = vmatprep.mubr.f32.mxu0 0.0
  %231 = vmatmul.mubr.f32.gmra.mxu0 %v93
  %v232 = vpop.f32.mrf.mxu0
  %v233 = vadd.f32 %v50, %v232
  %v234 = vpop.f32.mrf.mxu0
  %235 = vmatprep.mubr.f32.mxu0 0.0
  %236 = vmatmul.mubr.f32.gmra.mxu0 %v96
  %v237 = vpop.f32.mrf.mxu0
  %v238 = vadd.f32 %v50, %v237
  %v239 = vpop.f32.mrf.mxu0
  %240 = vmatprep.mubr.f32.mxu0 0.0
  %241 = vmatmul.mubr.f32.gmra.mxu0 %v99
  %v242 = vpop.f32.mrf.mxu0
  %v243 = vadd.f32 %v50, %v242
  %v244 = vpop.f32.mrf.mxu0
  %245 = vdwg.mxu0
  %v246 = vmax.f32 %v168, 0.0
  %v247 = vmax.f32 %v173, 0.0
  %v248 = vmax.f32 %v178, 0.0
  %v249 = vmax.f32 %v183, 0.0
  %v250 = vmax.f32 %v188, 0.0
  %v251 = vmax.f32 %v193, 0.0
  %v252 = vmax.f32 %v198, 0.0
  %v253 = vmax.f32 %v203, 0.0
  %v254 = vmax.f32 %v208, 0.0
  %v255 = vmax.f32 %v213, 0.0
  %v256 = vmax.f32 %v218, 0.0
  %v257 = vmax.f32 %v223, 0.0
  %v258 = vmax.f32 %v228, 0.0
  %v259 = vmax.f32 %v233, 0.0
  %v260 = vmax.f32 %v238, 0.0
  %v261 = vmax.f32 %v243, 0.0
  %v262 = vld [vmem:[%s3] sm:$0xff]
  %v263 = vld [vmem:[%s3 + $0x8] sm:$0xff]
  %v264 = vld [vmem:[%s3 + $0x10] sm:$0xff]
  %v265 = vld [vmem:[%s3 + $0x18] sm:$0xff]
  %v266 = vld [vmem:[%s4] sm:$0x1]
  %v268 = vlaneseq
  %v269 = vshrl.u32 %v268, 7
  %v270 = vsub.s32 0, %v269
  %v271 = vrot.slane %v266, %v270
  %vm273 = vcmask 261120
  %v275 = vsel %vm273, %v246, 0
  %v278 = vsel %vm273, %v247, 0
  %v281 = vsel %vm273, %v248, 0
  %v284 = vsel %vm273, %v249, 0
  %v287 = vsel %vm273, %v250, 0
  %v290 = vsel %vm273, %v251, 0
  %v293 = vsel %vm273, %v252, 0
  %v296 = vsel %vm273, %v253, 0
  %v299 = vsel %vm273, %v254, 0
  %v302 = vsel %vm273, %v255, 0
  %v305 = vsel %vm273, %v256, 0
  %v308 = vsel %vm273, %v257, 0
  %v311 = vsel %vm273, %v258, 0
  %v314 = vsel %vm273, %v259, 0
  %v317 = vsel %vm273, %v260, 0
  %v320 = vsel %vm273, %v261, 0
  %322 = vmatprep.subr.mxu0 0.0
  %323 = vmatpush1.msra.mxu0 0.0
  %324 = vmatprep.subr.mxu0 0.0
  %325 = vmatpush1.msra.mxu0 0.0
  %326 = vmatprep.subr.mxu0 0.0
  %327 = vmatpush1.msra.mxu0 0.0
  %328 = vmatprep.subr.mxu0 0.0
  %329 = vmatpush1.msra.mxu0 0.0
  %330 = vmatprep.subr.mxu0 0.0
  %331 = vmatpush1.msra.mxu0 0.0
  %332 = vmatprep.subr.mxu0 0.0
  %333 = vmatpush1.msra.mxu0 0.0
  %334 = vmatprep.subr.mxu0 0.0
  %335 = vmatpush1.msra.mxu0 0.0
  %336 = vmatprep.subr.mxu0 0.0
  %337 = vmatpush1.msra.mxu0 0.0
  %338 = vmatprep.subr.mxu0 0.0
  %339 = vmatpush1.msra.mxu0 0.0
  %340 = vmatprep.subr.mxu0 0.0
  %341 = vmatpush1.msra.mxu0 0.0
  %342 = vmatprep.subr.mxu0 0.0
  %343 = vmatpush1.msra.mxu0 0.0
  %344 = vmatprep.subr.mxu0 0.0
  %345 = vmatpush1.msra.mxu0 0.0
  %346 = vmatprep.subr.mxu0 0.0
  %347 = vmatpush1.msra.mxu0 %v265
  %348 = vmatprep.subr.mxu0 0.0
  %349 = vmatpush1.msra.mxu0 %v264
  %350 = vmatprep.subr.mxu0 0.0
  %351 = vmatpush1.msra.mxu0 %v263
  %352 = vmatprep.subr.mxu0 0.0
  %353 = vmatpush1.msra.mxu0 %v262
  %354 = vmatprep.subr.mxu0 0.0
  %355 = vmatpush2.msra.mxu0 0.0
  %356 = vmatprep.subr.mxu0 0.0
  %357 = vmatpush2.msra.mxu0 0.0
  %358 = vmatprep.subr.mxu0 0.0
  %359 = vmatpush2.msra.mxu0 0.0
  %360 = vmatprep.subr.mxu0 0.0
  %361 = vmatpush2.msra.mxu0 0.0
  %362 = vmatprep.subr.mxu0 0.0
  %363 = vmatpush2.msra.mxu0 0.0
  %364 = vmatprep.subr.mxu0 0.0
  %365 = vmatpush2.msra.mxu0 0.0
  %366 = vmatprep.subr.mxu0 0.0
  %367 = vmatpush2.msra.mxu0 0.0
  %368 = vmatprep.subr.mxu0 0.0
  %369 = vmatpush2.msra.mxu0 0.0
  %370 = vmatprep.subr.mxu0 0.0
  %371 = vmatpush2.msra.mxu0 0.0
  %372 = vmatprep.subr.mxu0 0.0
  %373 = vmatpush2.msra.mxu0 0.0
  %374 = vmatprep.subr.mxu0 0.0
  %375 = vmatpush2.msra.mxu0 0.0
  %376 = vmatprep.subr.mxu0 0.0
  %377 = vmatpush2.msra.mxu0 0.0
  %378 = vmatprep.subr.mxu0 0.0
  %379 = vmatpush2.msra.mxu0 0.0
  %380 = vmatprep.subr.mxu0 0.0
  %381 = vmatpush2.msra.mxu0 0.0
  %382 = vmatprep.subr.mxu0 0.0
  %383 = vmatpush2.msra.mxu0 0.0
  %384 = vmatprep.subr.mxu0 0.0
  %385 = vmatpush2.msra.mxu0 0.0
  %386 = vmatprep.mubr.f32.mxu0 0.0
  %387 = vmatmul.mubr.f32.gmra.mxu0 %v275
  %v388 = vpop.f32.mrf.mxu0
  %v389 = vadd.f32 %v271, %v388
  %v390 = vpop.f32.mrf.mxu0
  %391 = vmatprep.mubr.f32.mxu0 0.0
  %392 = vmatmul.mubr.f32.gmra.mxu0 %v278
  %v393 = vpop.f32.mrf.mxu0
  %v394 = vadd.f32 %v271, %v393
  %v395 = vpop.f32.mrf.mxu0
  %396 = vmatprep.mubr.f32.mxu0 0.0
  %397 = vmatmul.mubr.f32.gmra.mxu0 %v281
  %v398 = vpop.f32.mrf.mxu0
  %v399 = vadd.f32 %v271, %v398
  %v400 = vpop.f32.mrf.mxu0
  %401 = vmatprep.mubr.f32.mxu0 0.0
  %402 = vmatmul.mubr.f32.gmra.mxu0 %v284
  %v403 = vpop.f32.mrf.mxu0
  %v404 = vadd.f32 %v271, %v403
  %v405 = vpop.f32.mrf.mxu0
  %406 = vmatprep.mubr.f32.mxu0 0.0
  %407 = vmatmul.mubr.f32.gmra.mxu0 %v287
  %v408 = vpop.f32.mrf.mxu0
  %v409 = vadd.f32 %v271, %v408
  %v410 = vpop.f32.mrf.mxu0
  %411 = vmatprep.mubr.f32.mxu0 0.0
  %412 = vmatmul.mubr.f32.gmra.mxu0 %v290
  %v413 = vpop.f32.mrf.mxu0
  %v414 = vadd.f32 %v271, %v413
  %v415 = vpop.f32.mrf.mxu0
  %416 = vmatprep.mubr.f32.mxu0 0.0
  %417 = vmatmul.mubr.f32.gmra.mxu0 %v293
  %v418 = vpop.f32.mrf.mxu0
  %v419 = vadd.f32 %v271, %v418
  %v420 = vpop.f32.mrf.mxu0
  %421 = vmatprep.mubr.f32.mxu0 0.0
  %422 = vmatmul.mubr.f32.gmra.mxu0 %v296
  %v423 = vpop.f32.mrf.mxu0
  %v424 = vadd.f32 %v271, %v423
  %v425 = vpop.f32.mrf.mxu0
  %426 = vmatprep.mubr.f32.mxu0 0.0
  %427 = vmatmul.mubr.f32.gmra.mxu0 %v299
  %v428 = vpop.f32.mrf.mxu0
  %v429 = vadd.f32 %v271, %v428
  %v430 = vpop.f32.mrf.mxu0
  %431 = vmatprep.mubr.f32.mxu0 0.0
  %432 = vmatmul.mubr.f32.gmra.mxu0 %v302
  %v433 = vpop.f32.mrf.mxu0
  %v434 = vadd.f32 %v271, %v433
  %v435 = vpop.f32.mrf.mxu0
  %436 = vmatprep.mubr.f32.mxu0 0.0
  %437 = vmatmul.mubr.f32.gmra.mxu0 %v305
  %v438 = vpop.f32.mrf.mxu0
  %v439 = vadd.f32 %v271, %v438
  %v440 = vpop.f32.mrf.mxu0
  %441 = vmatprep.mubr.f32.mxu0 0.0
  %442 = vmatmul.mubr.f32.gmra.mxu0 %v308
  %v443 = vpop.f32.mrf.mxu0
  %v444 = vadd.f32 %v271, %v443
  %v445 = vpop.f32.mrf.mxu0
  %446 = vmatprep.mubr.f32.mxu0 0.0
  %447 = vmatmul.mubr.f32.gmra.mxu0 %v311
  %v448 = vpop.f32.mrf.mxu0
  %v449 = vadd.f32 %v271, %v448
  %v450 = vpop.f32.mrf.mxu0
  %451 = vmatprep.mubr.f32.mxu0 0.0
  %452 = vmatmul.mubr.f32.gmra.mxu0 %v314
  %v453 = vpop.f32.mrf.mxu0
  %v454 = vadd.f32 %v271, %v453
  %v455 = vpop.f32.mrf.mxu0
  %456 = vmatprep.mubr.f32.mxu0 0.0
  %457 = vmatmul.mubr.f32.gmra.mxu0 %v317
  %v458 = vpop.f32.mrf.mxu0
  %v459 = vadd.f32 %v271, %v458
  %v460 = vpop.f32.mrf.mxu0
  %461 = vmatprep.mubr.f32.mxu0 0.0
  %462 = vmatmul.mubr.f32.gmra.mxu0 %v320
  %v463 = vpop.f32.mrf.mxu0
  %v464 = vadd.f32 %v271, %v463
  %v465 = vpop.f32.mrf.mxu0
  %466 = vdwg.mxu0
  %v467 = vmax.f32 %v389, 0.0
  %v468 = vmax.f32 %v394, 0.0
  %v469 = vmax.f32 %v399, 0.0
  %v470 = vmax.f32 %v404, 0.0
  %v471 = vmax.f32 %v409, 0.0
  %v472 = vmax.f32 %v414, 0.0
  %v473 = vmax.f32 %v419, 0.0
  %v474 = vmax.f32 %v424, 0.0
  %v475 = vmax.f32 %v429, 0.0
  %v476 = vmax.f32 %v434, 0.0
  %v477 = vmax.f32 %v439, 0.0
  %v478 = vmax.f32 %v444, 0.0
  %v479 = vmax.f32 %v449, 0.0
  %v480 = vmax.f32 %v454, 0.0
  %v481 = vmax.f32 %v459, 0.0
  %v482 = vmax.f32 %v464, 0.0
  %v483 = vld [vmem:[%s5] sm:$0x1]
  %v485 = vlaneseq
  %v486 = vshrl.u32 %v485, 7
  %v487 = vsub.s32 0, %v486
  %v488 = vrot.slane %v483, %v487
  %v490 = vmul.f32 %v467, %v488
  %v491 = vmul.f32 %v468, %v488
  %v492 = vmul.f32 %v469, %v488
  %v493 = vmul.f32 %v470, %v488
  %v494 = vmul.f32 %v471, %v488
  %v495 = vmul.f32 %v472, %v488
  %v496 = vmul.f32 %v473, %v488
  %v497 = vmul.f32 %v474, %v488
  %v498 = vmul.f32 %v475, %v488
  %v499 = vmul.f32 %v476, %v488
  %v500 = vmul.f32 %v477, %v488
  %v501 = vmul.f32 %v478, %v488
  %v502 = vmul.f32 %v479, %v488
  %v503 = vmul.f32 %v480, %v488
  %v504 = vmul.f32 %v481, %v488
  %v505 = vmul.f32 %v482, %v488
  %v506 = vsel %vm273, %v490, 0.0
  %507 = vadd.xlane.f32.xlu0 %v506
  %v508 = vpop.xlane.xlu0 %507
  %v509 = vsel %vm273, %v491, 0.0
  %510 = vadd.xlane.f32.xlu0 %v509
  %v511 = vpop.xlane.xlu0 %510
  %v512 = vsel %vm273, %v492, 0.0
  %513 = vadd.xlane.f32.xlu0 %v512
  %v514 = vpop.xlane.xlu0 %513
  %v515 = vsel %vm273, %v493, 0.0
  %516 = vadd.xlane.f32.xlu0 %v515
  %v517 = vpop.xlane.xlu0 %516
  %v518 = vsel %vm273, %v494, 0.0
  %519 = vadd.xlane.f32.xlu0 %v518
  %v520 = vpop.xlane.xlu0 %519
  %v521 = vsel %vm273, %v495, 0.0
  %522 = vadd.xlane.f32.xlu0 %v521
  %v523 = vpop.xlane.xlu0 %522
  %v524 = vsel %vm273, %v496, 0.0
  %525 = vadd.xlane.f32.xlu0 %v524
  %v526 = vpop.xlane.xlu0 %525
  %v527 = vsel %vm273, %v497, 0.0
  %528 = vadd.xlane.f32.xlu0 %v527
  %v529 = vpop.xlane.xlu0 %528
  %v530 = vsel %vm273, %v498, 0.0
  %531 = vadd.xlane.f32.xlu0 %v530
  %v532 = vpop.xlane.xlu0 %531
  %v533 = vsel %vm273, %v499, 0.0
  %534 = vadd.xlane.f32.xlu0 %v533
  %v535 = vpop.xlane.xlu0 %534
  %v536 = vsel %vm273, %v500, 0.0
  %537 = vadd.xlane.f32.xlu0 %v536
  %v538 = vpop.xlane.xlu0 %537
  %v539 = vsel %vm273, %v501, 0.0
  %540 = vadd.xlane.f32.xlu0 %v539
  %v541 = vpop.xlane.xlu0 %540
  %v542 = vsel %vm273, %v502, 0.0
  %543 = vadd.xlane.f32.xlu0 %v542
  %v544 = vpop.xlane.xlu0 %543
  %v545 = vsel %vm273, %v503, 0.0
  %546 = vadd.xlane.f32.xlu0 %v545
  %v547 = vpop.xlane.xlu0 %546
  %v548 = vsel %vm273, %v504, 0.0
  %549 = vadd.xlane.f32.xlu0 %v548
  %v550 = vpop.xlane.xlu0 %549
  %v551 = vsel %vm273, %v505, 0.0
  %552 = vadd.xlane.f32.xlu0 %v551
  %v553 = vpop.xlane.xlu0 %552
  %s554 = sld [smem:[#allocation2]]
  %v555 = vstv %s554
  %v556 = vadd.f32 %v508, %v555
  %v557 = vadd.f32 %v511, %v555
  %v558 = vadd.f32 %v514, %v555
  %v559 = vadd.f32 %v517, %v555
  %v560 = vadd.f32 %v520, %v555
  %v561 = vadd.f32 %v523, %v555
  %v562 = vadd.f32 %v526, %v555
  %v563 = vadd.f32 %v529, %v555
  %v564 = vadd.f32 %v532, %v555
  %v565 = vadd.f32 %v535, %v555
  %v566 = vadd.f32 %v538, %v555
  %v567 = vadd.f32 %v541, %v555
  %v568 = vadd.f32 %v544, %v555
  %v569 = vadd.f32 %v547, %v555
  %v570 = vadd.f32 %v550, %v555
  %v571 = vadd.f32 %v553, %v555
  %v588 = vlaneseq
  %v589 = vand.u32 %v588, 127
  %v590 = vlaneseq
  %v591 = vshrl.u32 %v590, 7
  %v592 = vsub.s32 %v589, %v591
  %v593 = vrot.slane %v556, %v592
  %v594 = vadd.s32 %v589, 4294967288
  %v595 = vlaneseq
  %v596 = vshrl.u32 %v595, 7
  %v597 = vsub.s32 %v594, %v596
  %v598 = vrot.slane %v557, %v597
  %vm599 = vcmask 130112
  %v600 = vsel %vm599, %v598, %v593
  %v601 = vadd.s32 %v589, 4294967280
  %v602 = vlaneseq
  %v603 = vshrl.u32 %v602, 7
  %v604 = vsub.s32 %v601, %v603
  %v605 = vrot.slane %v558, %v604
  %vm606 = vcmask 195712
  %v607 = vsel %vm606, %v605, %v600
  %v608 = vadd.s32 %v589, 4294967272
  %v609 = vlaneseq
  %v610 = vshrl.u32 %v609, 7
  %v611 = vsub.s32 %v608, %v610
  %v612 = vrot.slane %v559, %v611
  %vm613 = vcmask 261312
  %v614 = vsel %vm613, %v612, %v607
  %v615 = vadd.s32 %v589, 4294967264
  %v616 = vlaneseq
  %v617 = vshrl.u32 %v616, 7
  %v618 = vsub.s32 %v615, %v617
  %v619 = vrot.slane %v560, %v618
  %vm620 = vcmask 326912
  %v621 = vsel %vm620, %v619, %v614
  %v622 = vadd.s32 %v589, 4294967256
  %v623 = vlaneseq
  %v624 = vshrl.u32 %v623, 7
  %v625 = vsub.s32 %v622, %v624
  %v626 = vrot.slane %v561, %v625
  %vm627 = vcmask 392512
  %v628 = vsel %vm627, %v626, %v621
  %v629 = vadd.s32 %v589, 4294967248
  %v630 = vlaneseq
  %v631 = vshrl.u32 %v630, 7
  %v632 = vsub.s32 %v629, %v631
  %v633 = vrot.slane %v562, %v632
  %vm634 = vcmask 458112
  %v635 = vsel %vm634, %v633, %v628
  %v636 = vadd.s32 %v589, 4294967240
  %v637 = vlaneseq
  %v638 = vshrl.u32 %v637, 7
  %v639 = vsub.s32 %v636, %v638
  %v640 = vrot.slane %v563, %v639
  %vm641 = vcmask 523712
  %v642 = vsel %vm641, %v640, %v635
  %v643 = vadd.s32 %v589, 4294967232
  %v644 = vlaneseq
  %v645 = vshrl.u32 %v644, 7
  %v646 = vsub.s32 %v643, %v645
  %v647 = vrot.slane %v564, %v646
  %vm648 = vcmask 589312
  %v649 = vsel %vm648, %v647, %v642
  %v650 = vadd.s32 %v589, 4294967224
  %v651 = vlaneseq
  %v652 = vshrl.u32 %v651, 7
  %v653 = vsub.s32 %v650, %v652
  %v654 = vrot.slane %v565, %v653
  %vm655 = vcmask 654912
  %v656 = vsel %vm655, %v654, %v649
  %v657 = vadd.s32 %v589, 4294967216
  %v658 = vlaneseq
  %v659 = vshrl.u32 %v658, 7
  %v660 = vsub.s32 %v657, %v659
  %v661 = vrot.slane %v566, %v660
  %vm662 = vcmask 720512
  %v663 = vsel %vm662, %v661, %v656
  %v664 = vadd.s32 %v589, 4294967208
  %v665 = vlaneseq
  %v666 = vshrl.u32 %v665, 7
  %v667 = vsub.s32 %v664, %v666
  %v668 = vrot.slane %v567, %v667
  %vm669 = vcmask 786112
  %v670 = vsel %vm669, %v668, %v663
  %v671 = vadd.s32 %v589, 4294967200
  %v672 = vlaneseq
  %v673 = vshrl.u32 %v672, 7
  %v674 = vsub.s32 %v671, %v673
  %v675 = vrot.slane %v568, %v674
  %vm676 = vcmask 851712
  %v677 = vsel %vm676, %v675, %v670
  %v678 = vadd.s32 %v589, 4294967192
  %v679 = vlaneseq
  %v680 = vshrl.u32 %v679, 7
  %v681 = vsub.s32 %v678, %v680
  %v682 = vrot.slane %v569, %v681
  %vm683 = vcmask 917312
  %v684 = vsel %vm683, %v682, %v677
  %v685 = vadd.s32 %v589, 4294967184
  %v686 = vlaneseq
  %v687 = vshrl.u32 %v686, 7
  %v688 = vsub.s32 %v685, %v687
  %v689 = vrot.slane %v570, %v688
  %vm690 = vcmask 982912
  %v691 = vsel %vm690, %v689, %v684
  %v692 = vadd.s32 %v589, 4294967176
  %v693 = vlaneseq
  %v694 = vshrl.u32 %v693, 7
  %v695 = vsub.s32 %v692, %v694
  %v696 = vrot.slane %v571, %v695
  %vm697 = vcmask 1048512
  %v698 = vsel %vm697, %v696, %v691
  %700 = vst [vmem:[%s7] sm:$0x1] %v698
  // Predicated region
  $region30: #{critic_forward.1} parent=0 // pred_check
    _
  $region31: #{critic_forward.1} parent=0 // pred_check_branch
    %702 = sbr.rel (0) target = $region33
  $region32: #{critic_forward.1} parent=0 // pred_region
    _
  $region33: #{critic_forward.1} parent=0 // pred_fallthru
    _
  // Predicated region
  $region34: #{critic_forward.1} parent=0 // pred_check
    _
  $region35: #{critic_forward.1} parent=0 // pred_check_branch
    %704 = sbr.rel (0) target = $region37
  $region36: #{critic_forward.1} parent=0 // pred_region
    _
  $region37: #{critic_forward.1} parent=0 // pred_fallthru
    _

</llo_original>
